<compile_context>
chip_gen: v6e
topology: v6e:2x2x1
jax: 0.10.0
libtpu: 0.0.40
codegen_flags: <defaults>
</compile_context>

<pallas_src>
import functools

import jax
import jax.numpy as jnp
from jax.experimental import pallas as pl
from jax.experimental.pallas import tpu as pltpu

_VPAD = 128  # lane-dense padding for the 50-wide value hidden layer


# ----------------------------------------------------------------------------
# Shared per-step math (values already resident in vregs)
# ----------------------------------------------------------------------------
def _worker_step(x, hx, cx, gsum,
                 w_cat, b_lstm, w_fc_tiled, b_fc_tiled,
                 w_v1, b_v1, w_v2_row, b_v2, segsum_pad, num_actions):
    """One Worker step. Returns (packed (B, H) slab = [policy|value|0...],
    hx_new, cx_new)."""
    B, H = hx.shape
    A = num_actions

    # ---- nn.LSTMCell, fused gates: [x, hx] @ [W_ih^T ; W_hh^T] + (b_ih + b_hh)
    xh = jnp.concatenate([x, hx], axis=-1)                                     # (B, 2H)
    gates = jnp.dot(xh, w_cat, preferred_element_type=jnp.float32) + b_lstm    # (B, 4H)
    i_g = jax.nn.sigmoid(gates[:, 0:H])
    f_g = jax.nn.sigmoid(gates[:, H:2 * H])
    g_g = jnp.tanh(gates[:, 2 * H:3 * H])
    o_g = jax.nn.sigmoid(gates[:, 3 * H:4 * H])
    cx_new = f_g * cx + i_g * g_g
    hx_new = o_g * jnp.tanh(cx_new)

    # ---- goal path (0/1 `expand` tiling folded into fc): action-tiled embedding
    ge_tiled = (jnp.dot(gsum, w_fc_tiled, preferred_element_type=jnp.float32)
                + b_fc_tiled)                                                  # (B, H)

    # ---- policy logits, lane-padded to H columns (cols >= A are exact zeros)
    logits = jnp.dot(hx_new * ge_tiled, segsum_pad,
                     preferred_element_type=jnp.float32)                       # (B, H)
    lane = jax.lax.broadcasted_iota(jnp.int32, (B, H), 1)
    valid = lane < A
    m = jnp.max(jnp.where(valid, logits, -jnp.inf), axis=-1, keepdims=True)
    e = jnp.where(valid, jnp.exp(logits - m), 0.0)
    policy_pad = e / jnp.sum(e, axis=-1, keepdims=True)                        # (B, H)

    # ---- value = fc_value2(relu(fc_value1(hx))); final 1-wide projection on VPU
    v1 = jnp.maximum(jnp.dot(hx_new, w_v1, preferred_element_type=jnp.float32)
                     + b_v1, 0.0)                                              # (B, 128)
    value = jnp.sum(v1 * w_v2_row, axis=-1, keepdims=True) + b_v2              # (B, 1)

    # ---- single lane-dense slab (one unmasked full-width store downstream)
    packed = policy_pad + jnp.where(lane == A, value, 0.0)                     # (B, H)
    return packed, hx_new, cx_new


# ----------------------------------------------------------------------------
# Kernels
# ----------------------------------------------------------------------------
def worker_kernel(x_ref, hx_ref, cx_ref, goals_ref,
                  w_cat_ref, b_lstm_ref, w_fc_tiled_ref, b_fc_tiled_ref,
                  w_v1_ref, b_v1_ref, w_v2_row_ref, b_v2_ref, segsum_ref,
                  pack_ref, hx_out_ref, cx_out_ref, *, num_actions):
    # goals: (T_goal, B, H) -> (B, H) with T_goal-1 VPU vreg adds.
    gsum = jnp.sum(goals_ref[...], axis=0)
    packed, hx_new, cx_new = _worker_step(
        x_ref[...], hx_ref[...], cx_ref[...], gsum,
        w_cat_ref[...], b_lstm_ref[...], w_fc_tiled_ref[...], b_fc_tiled_ref[...],
        w_v1_ref[...], b_v1_ref[...], w_v2_row_ref[...], b_v2_ref[...],
        segsum_ref[...], num_actions)
    pack_ref[...] = packed.astype(pack_ref.dtype)
    hx_out_ref[...] = hx_new.astype(hx_out_ref.dtype)
    cx_out_ref[...] = cx_new.astype(cx_out_ref.dtype)


def worker_rollout_kernel(hx0_ref, cx0_ref, x_ref, goals_ref,
                          w_cat_ref, b_lstm_ref, w_fc_tiled_ref, b_fc_tiled_ref,
                          w_v1_ref, b_v1_ref, w_v2_row_ref, b_v2_ref, segsum_ref,
                          pack_ref, hx_out_ref, cx_out_ref,
                          hx_s, cx_s, *, num_actions):
    t = pl.program_id(0)

    @pl.when(t == 0)
    def _():
        hx_s[...] = hx0_ref[...]
        cx_s[...] = cx0_ref[...]

    gsum = jnp.sum(goals_ref[0], axis=0)                 # (T_goal, B, H) -> (B, H)
    packed, hx_new, cx_new = _worker_step(
        x_ref[0], hx_s[...], cx_s[...], gsum,
        w_cat_ref[...], b_lstm_ref[...], w_fc_tiled_ref[...], b_fc_tiled_ref[...],
        w_v1_ref[...], b_v1_ref[...], w_v2_row_ref[...], b_v2_ref[...],
        segsum_ref[...], num_actions)

    hx_s[...] = hx_new                                   # carry across grid steps
    cx_s[...] = cx_new
    pack_ref[...] = packed[jnp.newaxis].astype(pack_ref.dtype)
    hx_out_ref[...] = hx_new.astype(hx_out_ref.dtype)
    cx_out_ref[...] = cx_new.astype(cx_out_ref.dtype)


# ----------------------------------------------------------------------------
# Wrappers
# ----------------------------------------------------------------------------
def _weights(prepped):
    return (prepped["w_cat"], prepped["b_lstm"],
            prepped["w_fc_tiled"], prepped["b_fc_tiled"],
            prepped["w_v1_pad"], prepped["b_v1_pad"],
            prepped["w_v2_row"], prepped["b_v2"],
            prepped["segsum_pad"])


def _vmem_spec():
    return pl.BlockSpec(memory_space=pltpu.MemorySpace.VMEM)


@functools.partial(jax.jit, static_argnames=("num_actions",))
def worker_forward(prepped, x, hx, cx, goals, *, num_actions):
    """Single-step Worker.forward((x, (hx, cx), goals)).

    `goals` uses the lane-dense layout (T_goal, B, H) — i.e. the PyTorch
    goals.permute(2, 0, 1) — so its reduction folds into the kernel.
    Returns (policy (B, A), (hx, cx), value (B, 1)).
    """
    B, H = x.shape
    A = num_actions
    assert H == A * 16

    inputs = (x, hx, cx, goals) + _weights(prepped)
    out_shape = (jax.ShapeDtypeStruct((B, H), jnp.float32),   # packed [policy|value]
                 jax.ShapeDtypeStruct((B, H), jnp.float32),   # hx
                 jax.ShapeDtypeStruct((B, H), jnp.float32))   # cx

    pack, hx_new, cx_new = pl.pallas_call(
        functools.partial(worker_kernel, num_actions=A),
        out_shape=out_shape,
        in_specs=[_vmem_spec() for _ in inputs],
        out_specs=tuple(_vmem_spec() for _ in out_shape),
        input_output_aliases={1: 1, 2: 2},   # hx -> hx_out, cx -> cx_out (in place)
    )(*inputs)

    return pack[:, :A], (hx_new, cx_new), pack[:, A:A + 1]


@functools.partial(jax.jit, static_argnames=("num_actions",))
def worker_rollout(prepped, x_seq, hx, cx, goals_seq, *, num_actions):
    """T-step Worker rollout in a single pallas_call (grid over timesteps).

    x_seq: (T, B, H); goals_seq: (T, T_goal, B, H); hx/cx: (B, H) initial state.
    Weights have constant index_maps (DMA'd once, VMEM-resident); hx/cx are
    carried in VMEM scratch; x/goals are streamed per step by the pipeline.
    Returns (policy_seq (T, B, A), (hx_T, cx_T), value_seq (T, B, 1)).
    """
    T, B, H = x_seq.shape
    A = num_actions
    assert H == A * 16
    Tg = goals_seq.shape[1]

    weights = _weights(prepped)

    def const2(shape):                       # constant 2-D block: fetched once
        return pl.BlockSpec(shape, lambda t: (0, 0))

    in_specs = ([const2(hx.shape), const2(cx.shape),
                 pl.BlockSpec((1, B, H), lambda t: (t, 0, 0)),
                 pl.BlockSpec((1, Tg, B, H), lambda t: (t, 0, 0, 0))]
                + [const2(w.shape) for w in weights])

    out_shape = (jax.ShapeDtypeStruct((T, B, H), jnp.float32),  # per-step packed
                 jax.ShapeDtypeStruct((B, H), jnp.float32),     # final hx
                 jax.ShapeDtypeStruct((B, H), jnp.float32))     # final cx
    out_specs = (pl.BlockSpec((1, B, H), lambda t: (t, 0, 0)),
                 const2((B, H)),
                 const2((B, H)))

    pack_seq, hx_f, cx_f = pl.pallas_call(
        functools.partial(worker_rollout_kernel, num_actions=A),
        out_shape=out_shape,
        grid=(T,),
        in_specs=in_specs,
        out_specs=out_specs,
        scratch_shapes=[pltpu.VMEM((B, H), jnp.float32),
                        pltpu.VMEM((B, H), jnp.float32)],
        compiler_params=pltpu.CompilerParams(
            dimension_semantics=("arbitrary",)),   # sequential recurrence
    )(hx, cx, x_seq, goals_seq, *weights)

    return pack_seq[:, :, :A], (hx_f, cx_f), pack_seq[:, :, A:A + 1]


# ----------------------------------------------------------------------------
# Parameters
# ----------------------------------------------------------------------------
def init_raw_params(key, num_actions):
    """Mirror the PyTorch __init__: default LSTMCell uniform weights with zeroed
    biases, kaiming_normal_(fan_out, relu) Linear weights, default-uniform biases."""
    H = num_actions * 16
    k = jax.random.split(key, 8)
    lim = 1.0 / jnp.sqrt(H)
    w_ih = jax.random.uniform(k[0], (4 * H, H), jnp.float32, -lim, lim)
    w_hh = jax.random.uniform(k[1], (4 * H, H), jnp.float32, -lim, lim)
    b_ih = jnp.zeros((4 * H,), jnp.float32)     # .fill_(0) in the PyTorch module
    b_hh = jnp.zeros((4 * H,), jnp.float32)
    w_fc = jax.random.normal(k[2], (16, H), jnp.float32) * jnp.sqrt(2.0 / 16)
    b_fc = jax.random.uniform(k[3], (16,), jnp.float32, -lim, lim)
    w_v1 = jax.random.normal(k[4], (50, H), jnp.float32) * jnp.sqrt(2.0 / 50)
    b_v1 = jax.random.uniform(k[5], (50,), jnp.float32, -lim, lim)
    w_v2 = jax.random.normal(k[6], (1, 50), jnp.float32) * jnp.sqrt(2.0 / 1)
    b_v2 = jax.random.uniform(k[7], (1,), jnp.float32,
                              -1.0 / jnp.sqrt(50.0), 1.0 / jnp.sqrt(50.0))
    return dict(w_ih=w_ih, w_hh=w_hh, b_ih=b_ih, b_hh=b_hh,
                w_fc=w_fc, b_fc=b_fc, w_v1=w_v1, b_v1=b_v1,
                w_v2=w_v2, b_v2=b_v2)


def prepare_params(raw, num_actions):
    """One-time fold/fuse/pad of raw weights into the kernel layout (amortized)."""
    H = num_actions * 16
    A = num_actions

    # Fused LSTM gate weight: gates = [x, hx] @ w_cat + b_lstm
    w_cat = jnp.concatenate([raw["w_ih"].T, raw["w_hh"].T], axis=0)            # (2H, 4H)
    b_lstm = (raw["b_ih"] + raw["b_hh"]).reshape(1, 4 * H)

    # Fold the 0/1 `expand` tiling matrix into fc: action-tiled goal embedding
    # from a single matmul.
    feat = jnp.arange(H)
    expand = (jnp.arange(16)[:, None] == (feat % 16)[None, :]).astype(jnp.float32)  # (16, H)
    w_fc_tiled = raw["w_fc"].T @ expand                                        # (H, H)
    b_fc_tiled = raw["b_fc"].reshape(1, 16) @ expand                           # (1, H)

    # Per-action segment-sum matrix, lane-padded to H output columns so the
    # policy logits land in an H-wide slab (single unmasked output store).
    segsum = ((feat[:, None] // 16) == jnp.arange(A)[None, :]).astype(jnp.float32)  # (H, A)
    segsum_pad = jnp.zeros((H, H), jnp.float32).at[:, :A].set(segsum)

    # Value head, lane-padded.  NOTE: bf16 cast of the big folded weights (v5e
    # DMA win) intentionally not applied to keep exact f32 parity.
    w_v1_pad = jnp.zeros((H, _VPAD), jnp.float32).at[:, :50].set(raw["w_v1"].T)
    b_v1_pad = jnp.zeros((1, _VPAD), jnp.float32).at[:, :50].set(raw["b_v1"])
    w_v2_row = jnp.zeros((1, _VPAD), jnp.float32).at[:, :50].set(raw["w_v2"])
    b_v2 = raw["b_v2"].reshape(1, 1)

    return dict(w_cat=w_cat, b_lstm=b_lstm,
                w_fc_tiled=w_fc_tiled, b_fc_tiled=b_fc_tiled,
                segsum_pad=segsum_pad,
                w_v1_pad=w_v1_pad, b_v1_pad=b_v1_pad,
                w_v2_row=w_v2_row, b_v2=b_v2)


def worker_reference(raw, x, hx, cx, goals_bht, num_actions):
    """Plain-JAX reference matching the PyTorch forward (goals in (B, H, T))."""
    H = hx.shape[-1]
    gates = x @ raw["w_ih"].T + raw["b_ih"] + hx @ raw["w_hh"].T + raw["b_hh"]
    i = jax.nn.sigmoid(gates[:, :H])
    f = jax.nn.sigmoid(gates[:, H:2 * H])
    g = jnp.tanh(gates[:, 2 * H:3 * H])
    o = jax.nn.sigmoid(gates[:, 3 * H:])
    cx_new = f * cx + i * g
    hx_new = o * jnp.tanh(cx_new)
    v = jnp.maximum(hx_new @ raw["w_v1"].T + raw["b_v1"], 0.0)
    value = v @ raw["w_v2"].T + raw["b_v2"]
    goal_embed = goals_bht.sum(-1) @ raw["w_fc"].T + raw["b_fc"]
    we = hx_new.reshape(hx_new.shape[0], num_actions, 16)
    logits = jnp.einsum("bak,bk->ba", we, goal_embed)
    policy = jax.nn.softmax(logits, axis=-1)
    return policy, (hx_new, cx_new), value


# ----------------------------------------------------------------------------
# Demo / verification
# ----------------------------------------------------------------------------
if __name__ == "__main__":
    A = 8              # num_actions -> hidden = A*16 = 128 (lane aligned)
    B = 8              # batch (one sublane tile)
    TG = 4             # trailing goal dim that gets summed (now in-kernel)
    T = 8              # rollout length for the multi-step kernel
    H = A * 16

    key = jax.random.PRNGKey(0)
    kp, kx, kh, kc, kg, kxs, kgs = jax.random.split(key, 7)
    raw = init_raw_params(kp, A)
    prepped = prepare_params(raw, A)

    x = jax.random.normal(kx, (B, H), jnp.float32)
    hx = jax.random.normal(kh, (B, H), jnp.float32)
    cx = jax.random.normal(kc, (B, H), jnp.float32)
    goals = jax.random.normal(kg, (TG, B, H), jnp.float32)     # lane-dense layout

    # ---- single-step kernel vs plain-JAX reference
    policy, (hx_n, cx_n), value = worker_forward(
        prepped, x, hx, cx, goals, num_actions=A)
    jax.block_until_ready((policy, hx_n, cx_n, value))

    goals_torch = jnp.transpose(goals, (1, 2, 0))              # (B, H, TG) torch layout
    p_ref, (h_ref, c_ref), v_ref = worker_reference(raw, x, hx, cx, goals_torch, A)
    assert jnp.allclose(policy, p_ref, atol=1e-5, rtol=1e-5)
    assert jnp.allclose(hx_n, h_ref, atol=1e-5, rtol=1e-5)
    assert jnp.allclose(cx_n, c_ref, atol=1e-5, rtol=1e-5)
    assert jnp.allclose(value, v_ref, atol=1e-5, rtol=1e-5)

    # ---- multi-step rollout kernel vs (a) iterated single-step kernel and
    #      (b) iterated plain-JAX reference
    x_seq = jax.random.normal(kxs, (T, B, H), jnp.float32)
    goals_seq = jax.random.normal(kgs, (T, TG, B, H), jnp.float32)

    p_seq, (hx_f, cx_f), v_seq = worker_rollout(
        prepped, x_seq, hx, cx, goals_seq, num_actions=A)
    jax.block_until_ready((p_seq, hx_f, cx_f, v_seq))

    h_k, c_k = hx, cx          # iterated single-step kernel
    h_r, c_r = hx, cx          # iterated plain-JAX reference
    for t in range(T):
        p_k, (h_k, c_k), v_k = worker_forward(
            prepped, x_seq[t], h_k, c_k, goals_seq[t], num_actions=A)
        assert jnp.allclose(p_seq[t], p_k, atol=1e-4, rtol=1e-5)
        assert jnp.allclose(v_seq[t], v_k, atol=1e-4, rtol=1e-5)

        g_torch = jnp.transpose(goals_seq[t], (1, 2, 0))
        p_r, (h_r, c_r), v_r = worker_reference(raw, x_seq[t], h_r, c_r, g_torch, A)
        assert jnp.allclose(p_seq[t], p_r, atol=5e-4, rtol=5e-4)
        assert jnp.allclose(v_seq[t], v_r, atol=5e-3, rtol=5e-4)

    assert jnp.allclose(hx_f, h_k, atol=1e-4, rtol=1e-5)
    assert jnp.allclose(cx_f, c_k, atol=1e-4, rtol=1e-5)
    assert jnp.allclose(hx_f, h_r, atol=5e-4, rtol=5e-4)
    assert jnp.allclose(cx_f, c_r, atol=5e-4, rtol=5e-4)

    print("KERNEL_OK")
</pallas_src>

<mosaic_0001>
module attributes {stable_mosaic.version = 11 : i64} {
  func.func @worker_kernel(%arg0: memref<8x128xf32, #tpu.memory_space<vmem>>, %arg1: memref<8x128xf32, #tpu.memory_space<vmem>>, %arg2: memref<8x128xf32, #tpu.memory_space<vmem>>, %arg3: memref<4x8x128xf32, #tpu.memory_space<vmem>>, %arg4: memref<256x512xf32, #tpu.memory_space<vmem>>, %arg5: memref<1x512xf32, #tpu.memory_space<vmem>>, %arg6: memref<128x128xf32, #tpu.memory_space<vmem>>, %arg7: memref<1x128xf32, #tpu.memory_space<vmem>>, %arg8: memref<128x128xf32, #tpu.memory_space<vmem>>, %arg9: memref<1x128xf32, #tpu.memory_space<vmem>>, %arg10: memref<1x128xf32, #tpu.memory_space<vmem>>, %arg11: memref<1x1xf32, #tpu.memory_space<vmem>>, %arg12: memref<128x128xf32, #tpu.memory_space<vmem>>, %arg13: memref<8x128xf32, #tpu.memory_space<vmem>>, %arg14: memref<8x128xf32, #tpu.memory_space<vmem>>, %arg15: memref<8x128xf32, #tpu.memory_space<vmem>>) attributes {dimension_semantics = [], scalar_prefetch = 0 : i64, scratch_operands = 0 : i64, tpu.core_type = #tpu.core_type<tc>} {
    %c0 = arith.constant 0 : index
    %c0_0 = arith.constant 0 : index
    %c0_1 = arith.constant 0 : index
    %0 = vector.load %arg3[%c0, %c0_0, %c0_1] : memref<4x8x128xf32, #tpu.memory_space<vmem>>, vector<4x8x128xf32>
    %cst = arith.constant dense<0.000000e+00> : vector<8x128xf32>
    %1 = vector.multi_reduction <add>, %0, %cst [0] : vector<4x8x128xf32> to vector<8x128xf32>
    %c0_2 = arith.constant 0 : index
    %c0_3 = arith.constant 0 : index
    %2 = vector.load %arg0[%c0_2, %c0_3] : memref<8x128xf32, #tpu.memory_space<vmem>>, vector<8x128xf32>
    %c0_4 = arith.constant 0 : index
    %c0_5 = arith.constant 0 : index
    %3 = vector.load %arg1[%c0_4, %c0_5] : memref<8x128xf32, #tpu.memory_space<vmem>>, vector<8x128xf32>
    %c0_6 = arith.constant 0 : index
    %c0_7 = arith.constant 0 : index
    %4 = vector.load %arg2[%c0_6, %c0_7] : memref<8x128xf32, #tpu.memory_space<vmem>>, vector<8x128xf32>
    %c0_8 = arith.constant 0 : index
    %c0_9 = arith.constant 0 : index
    %5 = vector.load %arg4[%c0_8, %c0_9] : memref<256x512xf32, #tpu.memory_space<vmem>>, vector<256x512xf32>
    %c0_10 = arith.constant 0 : index
    %c0_11 = arith.constant 0 : index
    %6 = vector.load %arg5[%c0_10, %c0_11] : memref<1x512xf32, #tpu.memory_space<vmem>>, vector<1x512xf32>
    %c0_12 = arith.constant 0 : index
    %c0_13 = arith.constant 0 : index
    %7 = vector.load %arg6[%c0_12, %c0_13] : memref<128x128xf32, #tpu.memory_space<vmem>>, vector<128x128xf32>
    %c0_14 = arith.constant 0 : index
    %c0_15 = arith.constant 0 : index
    %8 = vector.load %arg7[%c0_14, %c0_15] : memref<1x128xf32, #tpu.memory_space<vmem>>, vector<1x128xf32>
    %c0_16 = arith.constant 0 : index
    %c0_17 = arith.constant 0 : index
    %9 = vector.load %arg8[%c0_16, %c0_17] : memref<128x128xf32, #tpu.memory_space<vmem>>, vector<128x128xf32>
    %c0_18 = arith.constant 0 : index
    %c0_19 = arith.constant 0 : index
    %10 = vector.load %arg9[%c0_18, %c0_19] : memref<1x128xf32, #tpu.memory_space<vmem>>, vector<1x128xf32>
    %c0_20 = arith.constant 0 : index
    %c0_21 = arith.constant 0 : index
    %11 = vector.load %arg10[%c0_20, %c0_21] : memref<1x128xf32, #tpu.memory_space<vmem>>, vector<1x128xf32>
    %c0_22 = arith.constant 0 : index
    %c0_23 = arith.constant 0 : index
    %12 = vector.load %arg11[%c0_22, %c0_23] : memref<1x1xf32, #tpu.memory_space<vmem>>, vector<1x1xf32>
    %c0_24 = arith.constant 0 : index
    %c0_25 = arith.constant 0 : index
    %13 = vector.load %arg12[%c0_24, %c0_25] : memref<128x128xf32, #tpu.memory_space<vmem>>, vector<128x128xf32>
    %14 = tpu.concatenate %2, %3 in 1 : vector<8x128xf32>, vector<8x128xf32> -> vector<8x256xf32>
    %cst_26 = arith.constant dense<0.000000e+00> : vector<8x512xf32>
    %15 = tpu.matmul %14, %5, %cst_26 {dimension_numbers = #tpu.dot_dimension_numbers<[1], [0], [0], [1], [0, 0, 1, 1], [], []>} : vector<8x256xf32>, vector<256x512xf32>, vector<8x512xf32> -> vector<8x512xf32>
    %16 = vector.broadcast %6 : vector<1x512xf32> to vector<8x512xf32>
    %17 = arith.addf %15, %16 : vector<8x512xf32>
    %18 = vector.extract_strided_slice %17 {offsets = [0, 0], sizes = [8, 128], strides = [1, 1]} : vector<8x512xf32> to vector<8x128xf32>
    %19 = arith.negf %18 : vector<8x128xf32>
    %20 = math.exp %19 : vector<8x128xf32>
    %cst_27 = arith.constant 1.000000e+00 : f32
    %21 = vector.broadcast %cst_27 : f32 to vector<8x128xf32>
    %22 = arith.addf %21, %20 : vector<8x128xf32>
    %23 = arith.divf %21, %22 : vector<8x128xf32>
    %24 = vector.extract_strided_slice %17 {offsets = [0, 128], sizes = [8, 128], strides = [1, 1]} : vector<8x512xf32> to vector<8x128xf32>
    %25 = arith.negf %24 : vector<8x128xf32>
    %26 = math.exp %25 : vector<8x128xf32>
    %cst_28 = arith.constant 1.000000e+00 : f32
    %27 = vector.broadcast %cst_28 : f32 to vector<8x128xf32>
    %28 = arith.addf %27, %26 : vector<8x128xf32>
    %29 = arith.divf %27, %28 : vector<8x128xf32>
    %30 = vector.extract_strided_slice %17 {offsets = [0, 256], sizes = [8, 128], strides = [1, 1]} : vector<8x512xf32> to vector<8x128xf32>
    %31 = math.tanh %30 : vector<8x128xf32>
    %32 = vector.extract_strided_slice %17 {offsets = [0, 384], sizes = [8, 128], strides = [1, 1]} : vector<8x512xf32> to vector<8x128xf32>
    %33 = arith.negf %32 : vector<8x128xf32>
    %34 = math.exp %33 : vector<8x128xf32>
    %cst_29 = arith.constant 1.000000e+00 : f32
    %35 = vector.broadcast %cst_29 : f32 to vector<8x128xf32>
    %36 = arith.addf %35, %34 : vector<8x128xf32>
    %37 = arith.divf %35, %36 : vector<8x128xf32>
    %38 = arith.mulf %29, %4 : vector<8x128xf32>
    %39 = arith.mulf %23, %31 : vector<8x128xf32>
    %40 = arith.addf %38, %39 : vector<8x128xf32>
    %41 = math.tanh %40 : vector<8x128xf32>
    %42 = arith.mulf %37, %41 : vector<8x128xf32>
    %cst_30 = arith.constant dense<0.000000e+00> : vector<8x128xf32>
    %43 = tpu.matmul %1, %7, %cst_30 {dimension_numbers = #tpu.dot_dimension_numbers<[1], [0], [0], [1], [0, 0, 1, 1], [], []>} : vector<8x128xf32>, vector<128x128xf32>, vector<8x128xf32> -> vector<8x128xf32>
    %44 = vector.broadcast %8 : vector<1x128xf32> to vector<8x128xf32>
    %45 = arith.addf %43, %44 : vector<8x128xf32>
    %46 = arith.mulf %42, %45 : vector<8x128xf32>
    %cst_31 = arith.constant dense<0.000000e+00> : vector<8x128xf32>
    %47 = tpu.matmul %46, %13, %cst_31 {dimension_numbers = #tpu.dot_dimension_numbers<[1], [0], [0], [1], [0, 0, 1, 1], [], []>} : vector<8x128xf32>, vector<128x128xf32>, vector<8x128xf32> -> vector<8x128xf32>
    %48 = tpu.iota {dimensions = array<i32: 1>} : vector<8x128xi32>
    %c8_i32 = arith.constant 8 : i32
    %49 = vector.broadcast %c8_i32 : i32 to vector<8x128xi32>
    %50 = arith.cmpi slt, %48, %49 : vector<8x128xi32>
    %cst_32 = arith.constant 0xFF800000 : f32
    %51 = vector.broadcast %cst_32 : f32 to vector<8x128xf32>
    %52 = arith.select %50, %47, %51 : vector<8x128xi1>, vector<8x128xf32>
    %cst_33 = arith.constant dense<0xFF800000> : vector<8xf32>
    %53 = vector.multi_reduction <maximumf>, %52, %cst_33 [1] : vector<8x128xf32> to vector<8xf32>
    %54 = vector.shape_cast %53 : vector<8xf32> to vector<8x1xf32>
    %55 = vector.broadcast %54 : vector<8x1xf32> to vector<8x128xf32>
    %56 = arith.subf %47, %55 : vector<8x128xf32>
    %57 = math.exp %56 : vector<8x128xf32>
    %cst_34 = arith.constant 0.000000e+00 : f32
    %58 = vector.broadcast %cst_34 : f32 to vector<8x128xf32>
    %59 = arith.select %50, %57, %58 : vector<8x128xi1>, vector<8x128xf32>
    %cst_35 = arith.constant dense<0.000000e+00> : vector<8xf32>
    %60 = vector.multi_reduction <add>, %59, %cst_35 [1] : vector<8x128xf32> to vector<8xf32>
    %61 = vector.shape_cast %60 : vector<8xf32> to vector<8x1xf32>
    %62 = vector.broadcast %61 : vector<8x1xf32> to vector<8x128xf32>
    %63 = arith.divf %59, %62 : vector<8x128xf32>
    %cst_36 = arith.constant dense<0.000000e+00> : vector<8x128xf32>
    %64 = tpu.matmul %42, %9, %cst_36 {dimension_numbers = #tpu.dot_dimension_numbers<[1], [0], [0], [1], [0, 0, 1, 1], [], []>} : vector<8x128xf32>, vector<128x128xf32>, vector<8x128xf32> -> vector<8x128xf32>
    %65 = vector.broadcast %10 : vector<1x128xf32> to vector<8x128xf32>
    %66 = arith.addf %64, %65 : vector<8x128xf32>
    %cst_37 = arith.constant 0.000000e+00 : f32
    %67 = vector.broadcast %cst_37 : f32 to vector<8x128xf32>
    %68 = arith.maximumf %66, %67 : vector<8x128xf32>
    %69 = vector.broadcast %11 : vector<1x128xf32> to vector<8x128xf32>
    %70 = arith.mulf %68, %69 : vector<8x128xf32>
    %cst_38 = arith.constant dense<0.000000e+00> : vector<8xf32>
    %71 = vector.multi_reduction <add>, %70, %cst_38 [1] : vector<8x128xf32> to vector<8xf32>
    %72 = vector.shape_cast %71 : vector<8xf32> to vector<8x1xf32>
    %73 = vector.broadcast %12 : vector<1x1xf32> to vector<8x1xf32>
    %74 = arith.addf %72, %73 : vector<8x1xf32>
    %c8_i32_39 = arith.constant 8 : i32
    %75 = vector.broadcast %c8_i32_39 : i32 to vector<8x128xi32>
    %76 = arith.cmpi eq, %48, %75 : vector<8x128xi32>
    %cst_40 = arith.constant 0.000000e+00 : f32
    %77 = vector.shape_cast %74 : vector<8x1xf32> to vector<8x1xf32>
    %78 = vector.broadcast %77 : vector<8x1xf32> to vector<8x128xf32>
    %79 = vector.broadcast %cst_40 : f32 to vector<8x128xf32>
    %80 = arith.select %76, %78, %79 : vector<8x128xi1>, vector<8x128xf32>
    %81 = arith.addf %63, %80 : vector<8x128xf32>
    %c0_41 = arith.constant 0 : index
    %c0_42 = arith.constant 0 : index
    %82 = vector.load %arg13[%c0_41, %c0_42] : memref<8x128xf32, #tpu.memory_space<vmem>>, vector<8x128xf32>
    tpu.vector_store %arg13[%c0_41, %c0_42], %81 {strides = array<i32>} : memref<8x128xf32, #tpu.memory_space<vmem>>, vector<8x128xf32>,
    %c0_43 = arith.constant 0 : index
    %c0_44 = arith.constant 0 : index
    %83 = vector.load %arg14[%c0_43, %c0_44] : memref<8x128xf32, #tpu.memory_space<vmem>>, vector<8x128xf32>
    tpu.vector_store %arg14[%c0_43, %c0_44], %42 {strides = array<i32>} : memref<8x128xf32, #tpu.memory_space<vmem>>, vector<8x128xf32>,
    %c0_45 = arith.constant 0 : index
    %c0_46 = arith.constant 0 : index
    %84 = vector.load %arg15[%c0_45, %c0_46] : memref<8x128xf32, #tpu.memory_space<vmem>>, vector<8x128xf32>
    tpu.vector_store %arg15[%c0_45, %c0_46], %40 {strides = array<i32>} : memref<8x128xf32, #tpu.memory_space<vmem>>, vector<8x128xf32>,
    return
  }
}

</mosaic_0001>

<llo_original>
// kernel: worker_forward.1
$region0: #{worker_forward.1}
  #allocation0 [shape = 'u32[]', space=smem, size = 0x4, offset = 0x4, fixed_abs, tag = 'smem constant byte address 0x4 - core index']
  #allocation1 [shape = 'u32[144,128]{1,0:T(1,128)}', space=vmem, size = 0x12000, scoped, tag = 'internal scratch']
  #allocation2 [shape = 'f32[1,1]{1,0:T(1,128)S(1)}', space=vmem, size = 0x200, scoped, tag = 'scoped memory for worker_forward.1']
  %s0 = inlined_call_operand.vmem [shape: f32[8,128], index: 0, kind: input, shape index: {}]
  %s1 = inlined_call_operand.vmem [shape: f32[8,128], index: 1, kind: input, shape index: {}, may-alias: {1,14}]
  %s2 = inlined_call_operand.vmem [shape: f32[8,128], index: 2, kind: input, shape index: {}, may-alias: {2,15}]
  %s3 = inlined_call_operand.hbm [shape: f32[4,8,128], index: 3, kind: input, shape index: {}]
  %s4 = inlined_call_operand.hbm [shape: f32[256,512], index: 4, kind: input, shape index: {}]
  %s5 = inlined_call_operand.vmem [shape: f32[1,512], index: 5, kind: input, shape index: {}]
  %s6 = inlined_call_operand.hbm [shape: f32[128,128], index: 6, kind: input, shape index: {}]
  %s7 = inlined_call_operand.vmem [shape: f32[1,128], index: 7, kind: input, shape index: {}]
  %s8 = inlined_call_operand.hbm [shape: f32[128,128], index: 8, kind: input, shape index: {}]
  %s9 = inlined_call_operand.vmem [shape: f32[1,128], index: 9, kind: input, shape index: {}]
  %s10 = inlined_call_operand.vmem [shape: f32[1,128], index: 10, kind: input, shape index: {}]
  %s11 = inlined_call_operand.<no memory space> [shape: f32[1,1], index: 11, kind: input, shape index: {}]
  %s12 = inlined_call_operand.hbm [shape: f32[128,128], index: 12, kind: input, shape index: {}]
  %s13 = inlined_call_operand.vmem [shape: f32[8,128], index: 13, kind: output, shape index: {0}]
  %s14 = inlined_call_operand.vmem [shape: f32[8,128], index: 14, kind: output, shape index: {1}, may-alias: {1,14}]
  %s15 = inlined_call_operand.vmem [shape: f32[8,128], index: 15, kind: output, shape index: {2}, may-alias: {2,15}]
  %16 = xla_tuple %s13, %s14, %s15
  %s17 = sld [smem:[#allocation0]]
  $region98: #{worker_forward.1} parent=0
    _
  %s19 = ssub.s32 1, %s17
  %s20 = scalar_select 0, %s19, %s17
  %v21 = vstv %s11
  %22 = vst [vmem:[#allocation2] sm:$0x1] %v21
  $region1: #{worker_forward.1} parent=0
    #allocation3 [shape = 'u8[16384]{0}', space=vmem, size = 0x4000, scoped, tag = 'input window, operand 3, single buffered']
    #allocation4 [shape = 's32[1]{0}', space=sflag, size = 0x4, scoped, tag = 'scoped memory for worker_forward.1']
    #allocation5 [shape = 'u8[524288]{0}', space=vmem, size = 0x80000, scoped, tag = 'input window, operand 4, single buffered']
    #allocation6 [shape = 's32[1]{0}', space=sflag, size = 0x4, scoped, tag = 'scoped memory for worker_forward.1']
    #allocation7 [shape = 'u8[65536]{0}', space=vmem, size = 0x10000, scoped, tag = 'input window, operand 6, single buffered']
    #allocation8 [shape = 'u8[65536]{0}', space=vmem, size = 0x10000, scoped, tag = 'input window, operand 8, single buffered']
    #allocation9 [shape = 's32[1]{0}', space=sflag, size = 0x4, scoped, tag = 'scoped memory for worker_forward.1']
    #allocation10 [shape = 'u8[65536]{0}', space=vmem, size = 0x10000, scoped, tag = 'input window, operand 12, single buffered']
    %23 = vsyncpa [#allocation4], 0
    %24 = vsyncpa [#allocation6], 0
    %25 = vsyncpa [#allocation9], 0
    // Predicated region
    $region2: #{worker_forward.1} parent=1 // pred_check
      _
    $region3: #{worker_forward.1} parent=1 // pred_check_branch
      %27 = sbr.rel (0) target = $region5
    $region4: #{worker_forward.1} parent=1 // pred_region
      _
    $region5: #{worker_forward.1} parent=1 // pred_fallthru
      _
    // Predicated region
    $region6: #{worker_forward.1} parent=1 // pred_check
      _
    $region7: #{worker_forward.1} parent=1 // pred_check_branch
      %29 = sbr.rel (0) target = $region9
    $region8: #{worker_forward.1} parent=1 // pred_region
      _
    $region9: #{worker_forward.1} parent=1 // pred_fallthru
      _
    // Predicated region
    $region10: #{worker_forward.1} parent=1 // pred_check
      _
    $region11: #{worker_forward.1} parent=1 // pred_check_branch
      %31 = sbr.rel (0) target = $region13
    $region12: #{worker_forward.1} parent=1 // pred_region
      _
    $region13: #{worker_forward.1} parent=1 // pred_fallthru
      _
    // Predicated region
    $region14: #{worker_forward.1} parent=1 // pred_check
      _
    $region15: #{worker_forward.1} parent=1 // pred_check_branch
      %33 = sbr.rel (0) target = $region17
    $region16: #{worker_forward.1} parent=1 // pred_region
      %s35 = ssub.s32 512, 512
      %36 = vsyncadd [#allocation4], %s35
      %s37 = sshll.u32 [#allocation3], 4
      %s38 = int_to_ptr.vmem [resolvable:$true] %s37
      %43 = dma.hbm_to_vmem [thread:$0]  %s3, 512, %s38, [#allocation4], 128, 128, 8
    $region17: #{worker_forward.1} parent=1 // pred_fallthru
      _
    // Predicated region
    $region18: #{worker_forward.1} parent=1 // pred_check
      _
    $region19: #{worker_forward.1} parent=1 // pred_check_branch
      %45 = sbr.rel (0) target = $region21
    $region20: #{worker_forward.1} parent=1 // pred_region
      %s47 = ssub.s32 16384, 16384
      %48 = vsyncadd [#allocation6], %s47
      %s49 = sshll.u32 [#allocation5], 4
      %s50 = int_to_ptr.vmem [resolvable:$true] %s49
      %55 = dma.hbm_to_vmem [thread:$0]  %s4, 16384, %s50, [#allocation6], 512, 512, 32
    $region21: #{worker_forward.1} parent=1 // pred_fallthru
      _
    // Predicated region
    $region22: #{worker_forward.1} parent=1 // pred_check
      _
    $region23: #{worker_forward.1} parent=1 // pred_check_branch
      %57 = sbr.rel (0) target = $region25
    $region24: #{worker_forward.1} parent=1 // pred_region
      _
    $region25: #{worker_forward.1} parent=1 // pred_fallthru
      _
    // Predicated region
    $region26: #{worker_forward.1} parent=1 // pred_check
      _
    $region27: #{worker_forward.1} parent=1 // pred_check_branch
      %59 = sbr.rel (0) target = $region29
    $region28: #{worker_forward.1} parent=1 // pred_region
      %s61 = ssub.s32 2048, 2048
      %62 = vsyncadd [#allocation6], %s61
      %s63 = sshll.u32 [#allocation7], 4
      %s64 = int_to_ptr.vmem [resolvable:$true] %s63
      %69 = dma.hbm_to_vmem [thread:$0]  %s6, 2048, %s64, [#allocation6], 128, 128, 8
    $region29: #{worker_forward.1} parent=1 // pred_fallthru
      _
    // Predicated region
    $region30: #{worker_forward.1} parent=1 // pred_check
      _
    $region31: #{worker_forward.1} parent=1 // pred_check_branch
      %71 = sbr.rel (0) target = $region33
    $region32: #{worker_forward.1} parent=1 // pred_region
      _
    $region33: #{worker_forward.1} parent=1 // pred_fallthru
      _
    // Predicated region
    $region34: #{worker_forward.1} parent=1 // pred_check
      _
    $region35: #{worker_forward.1} parent=1 // pred_check_branch
      %73 = sbr.rel (0) target = $region37
    $region36: #{worker_forward.1} parent=1 // pred_region
      %s75 = ssub.s32 2048, 2048
      %76 = vsyncadd [#allocation9], %s75
      %s77 = sshll.u32 [#allocation8], 4
      %s78 = int_to_ptr.vmem [resolvable:$true] %s77
      %83 = dma.hbm_to_vmem [thread:$0]  %s8, 2048, %s78, [#allocation9], 128, 128, 8
    $region37: #{worker_forward.1} parent=1 // pred_fallthru
      _
    // Predicated region
    $region38: #{worker_forward.1} parent=1 // pred_check
      _
    $region39: #{worker_forward.1} parent=1 // pred_check_branch
      %85 = sbr.rel (0) target = $region41
    $region40: #{worker_forward.1} parent=1 // pred_region
      _
    $region41: #{worker_forward.1} parent=1 // pred_fallthru
      _
    // Predicated region
    $region42: #{worker_forward.1} parent=1 // pred_check
      _
    $region43: #{worker_forward.1} parent=1 // pred_check_branch
      %87 = sbr.rel (0) target = $region45
    $region44: #{worker_forward.1} parent=1 // pred_region
      _
    $region45: #{worker_forward.1} parent=1 // pred_fallthru
      _
    // Predicated region
    $region46: #{worker_forward.1} parent=1 // pred_check
      _
    $region47: #{worker_forward.1} parent=1 // pred_check_branch
      %89 = sbr.rel (0) target = $region49
    $region48: #{worker_forward.1} parent=1 // pred_region
      _
    $region49: #{worker_forward.1} parent=1 // pred_fallthru
      _
    // Predicated region
    $region50: #{worker_forward.1} parent=1 // pred_check
      _
    $region51: #{worker_forward.1} parent=1 // pred_check_branch
      %91 = sbr.rel (0) target = $region53
    $region52: #{worker_forward.1} parent=1 // pred_region
      %s93 = ssub.s32 2048, 2048
      %94 = vsyncadd [#allocation9], %s93
      %s95 = sshll.u32 [#allocation10], 4
      %s96 = int_to_ptr.vmem [resolvable:$true] %s95
      %101 = dma.hbm_to_vmem [thread:$0]  %s12, 2048, %s96, [#allocation9], 128, 128, 8
    $region53: #{worker_forward.1} parent=1 // pred_fallthru
      _
    // Predicated region
    $region54: #{worker_forward.1} parent=1 // pred_check
      _
    $region55: #{worker_forward.1} parent=1 // pred_check_branch
      %103 = sbr.rel (0) target = $region57
    $region56: #{worker_forward.1} parent=1 // pred_region
      %104 = dma.done [#allocation4], 512
    $region57: #{worker_forward.1} parent=1 // pred_fallthru
      _
    // Predicated region
    $region58: #{worker_forward.1} parent=1 // pred_check
      _
    $region59: #{worker_forward.1} parent=1 // pred_check_branch
      %106 = sbr.rel (0) target = $region61
    $region60: #{worker_forward.1} parent=1 // pred_region
      %107 = dma.done [#allocation6], 16384
    $region61: #{worker_forward.1} parent=1 // pred_fallthru
      _
    // Predicated region
    $region62: #{worker_forward.1} parent=1 // pred_check
      _
    $region63: #{worker_forward.1} parent=1 // pred_check_branch
      %109 = sbr.rel (0) target = $region65
    $region64: #{worker_forward.1} parent=1 // pred_region
      %110 = dma.done [#allocation6], 2048
    $region65: #{worker_forward.1} parent=1 // pred_fallthru
      _
    // Predicated region
    $region66: #{worker_forward.1} parent=1 // pred_check
      _
    $region67: #{worker_forward.1} parent=1 // pred_check_branch
      %112 = sbr.rel (0) target = $region69
    $region68: #{worker_forward.1} parent=1 // pred_region
      %113 = dma.done [#allocation9], 2048
    $region69: #{worker_forward.1} parent=1 // pred_fallthru
      _
    // Predicated region
    $region70: #{worker_forward.1} parent=1 // pred_check
      _
    $region71: #{worker_forward.1} parent=1 // pred_check_branch
      %115 = sbr.rel (0) target = $region73
    $region72: #{worker_forward.1} parent=1 // pred_region
      %116 = dma.done [#allocation9], 2048
    $region73: #{worker_forward.1} parent=1 // pred_fallthru
      _
    %v117 = vld [vmem:[#allocation3] sm:$0xff]
    %v118 = vld [vmem:[#allocation3 + $0x8] sm:$0xff]
    %v119 = vld [vmem:[#allocation3 + $0x10] sm:$0xff]
    %v120 = vld [vmem:[#allocation3 + $0x18] sm:$0xff]
    %v121 = vadd.f32 %v117, %v118
    %v122 = vadd.f32 %v121, %v119
    %v123 = vadd.f32 %v122, %v120
    %v124 = vld [vmem:[%s0] sm:$0xff]
    %v125 = vld [vmem:[%s1] sm:$0xff]
    %v126 = vld [vmem:[%s2] sm:$0xff]
    %v127 = vld [vmem:[#allocation5] sm:$0xff]
    %v128 = vld [vmem:[#allocation5 + $0x8] sm:$0xff]
    %v129 = vld [vmem:[#allocation5 + $0x10] sm:$0xff]
    %v130 = vld [vmem:[#allocation5 + $0x18] sm:$0xff]
    %v131 = vld [vmem:[#allocation5 + $0x20] sm:$0xff]
    %v132 = vld [vmem:[#allocation5 + $0x28] sm:$0xff]
    %v133 = vld [vmem:[#allocation5 + $0x30] sm:$0xff]
    %v134 = vld [vmem:[#allocation5 + $0x38] sm:$0xff]
    %v135 = vld [vmem:[#allocation5 + $0x40] sm:$0xff]
    %v136 = vld [vmem:[#allocation5 + $0x48] sm:$0xff]
    %v137 = vld [vmem:[#allocation5 + $0x50] sm:$0xff]
    %v138 = vld [vmem:[#allocation5 + $0x58] sm:$0xff]
    %v139 = vld [vmem:[#allocation5 + $0x60] sm:$0xff]
    %v140 = vld [vmem:[#allocation5 + $0x68] sm:$0xff]
    %v141 = vld [vmem:[#allocation5 + $0x70] sm:$0xff]
    %v142 = vld [vmem:[#allocation5 + $0x78] sm:$0xff]
    %v143 = vld [vmem:[#allocation5 + $0x80] sm:$0xff]
    %v144 = vld [vmem:[#allocation5 + $0x88] sm:$0xff]
    %v145 = vld [vmem:[#allocation5 + $0x90] sm:$0xff]
    %v146 = vld [vmem:[#allocation5 + $0x98] sm:$0xff]
    %v147 = vld [vmem:[#allocation5 + $0xa0] sm:$0xff]
    %v148 = vld [vmem:[#allocation5 + $0xa8] sm:$0xff]
    %v149 = vld [vmem:[#allocation5 + $0xb0] sm:$0xff]
    %v150 = vld [vmem:[#allocation5 + $0xb8] sm:$0xff]
    %v151 = vld [vmem:[#allocation5 + $0xc0] sm:$0xff]
    %v152 = vld [vmem:[#allocation5 + $0xc8] sm:$0xff]
    %v153 = vld [vmem:[#allocation5 + $0xd0] sm:$0xff]
    %v154 = vld [vmem:[#allocation5 + $0xd8] sm:$0xff]
    %v155 = vld [vmem:[#allocation5 + $0xe0] sm:$0xff]
    %v156 = vld [vmem:[#allocation5 + $0xe8] sm:$0xff]
    %v157 = vld [vmem:[#allocation5 + $0xf0] sm:$0xff]
    %v158 = vld [vmem:[#allocation5 + $0xf8] sm:$0xff]
    %v159 = vld [vmem:[#allocation5 + $0x100] sm:$0xff]
    %v160 = vld [vmem:[#allocation5 + $0x108] sm:$0xff]
    %v161 = vld [vmem:[#allocation5 + $0x110] sm:$0xff]
    %v162 = vld [vmem:[#allocation5 + $0x118] sm:$0xff]
    %v163 = vld [vmem:[#allocation5 + $0x120] sm:$0xff]
    %v164 = vld [vmem:[#allocation5 + $0x128] sm:$0xff]
    %v165 = vld [vmem:[#allocation5 + $0x130] sm:$0xff]
    %v166 = vld [vmem:[#allocation5 + $0x138] sm:$0xff]
    %v167 = vld [vmem:[#allocation5 + $0x140] sm:$0xff]
    %v168 = vld [vmem:[#allocation5 + $0x148] sm:$0xff]
    %v169 = vld [vmem:[#allocation5 + $0x150] sm:$0xff]
    %v170 = vld [vmem:[#allocation5 + $0x158] sm:$0xff]
    %v171 = vld [vmem:[#allocation5 + $0x160] sm:$0xff]
    %v172 = vld [vmem:[#allocation5 + $0x168] sm:$0xff]
    %v173 = vld [vmem:[#allocation5 + $0x170] sm:$0xff]
    %v174 = vld [vmem:[#allocation5 + $0x178] sm:$0xff]
    %v175 = vld [vmem:[#allocation5 + $0x180] sm:$0xff]
    %v176 = vld [vmem:[#allocation5 + $0x188] sm:$0xff]
    %v177 = vld [vmem:[#allocation5 + $0x190] sm:$0xff]
    %v178 = vld [vmem:[#allocation5 + $0x198] sm:$0xff]
    %v179 = vld [vmem:[#allocation5 + $0x1a0] sm:$0xff]
    %v180 = vld [vmem:[#allocation5 + $0x1a8] sm:$0xff]
    %v181 = vld [vmem:[#allocation5 + $0x1b0] sm:$0xff]
    %v182 = vld [vmem:[#allocation5 + $0x1b8] sm:$0xff]
    %v183 = vld [vmem:[#allocation5 + $0x1c0] sm:$0xff]
    %v184 = vld [vmem:[#allocation5 + $0x1c8] sm:$0xff]
    %v185 = vld [vmem:[#allocation5 + $0x1d0] sm:$0xff]
    %v186 = vld [vmem:[#allocation5 + $0x1d8] sm:$0xff]
    %v187 = vld [vmem:[#allocation5 + $0x1e0] sm:$0xff]
    %v188 = vld [vmem:[#allocation5 + $0x1e8] sm:$0xff]
    %v189 = vld [vmem:[#allocation5 + $0x1f0] sm:$0xff]
    %v190 = vld [vmem:[#allocation5 + $0x1f8] sm:$0xff]
    %v191 = vld [vmem:[#allocation5 + $0x200] sm:$0xff]
    %v192 = vld [vmem:[#allocation5 + $0x208] sm:$0xff]
    %v193 = vld [vmem:[#allocation5 + $0x210] sm:$0xff]
    %v194 = vld [vmem:[#allocation5 + $0x218] sm:$0xff]
    %v195 = vld [vmem:[#allocation5 + $0x220] sm:$0xff]
    %v196 = vld [vmem:[#allocation5 + $0x228] sm:$0xff]
    %v197 = vld [vmem:[#allocation5 + $0x230] sm:$0xff]
    %v198 = vld [vmem:[#allocation5 + $0x238] sm:$0xff]
    %v199 = vld [vmem:[#allocation5 + $0x240] sm:$0xff]
    %v200 = vld [vmem:[#allocation5 + $0x248] sm:$0xff]
    %v201 = vld [vmem:[#allocation5 + $0x250] sm:$0xff]
    %v202 = vld [vmem:[#allocation5 + $0x258] sm:$0xff]
    %v203 = vld [vmem:[#allocation5 + $0x260] sm:$0xff]
    %v204 = vld [vmem:[#allocation5 + $0x268] sm:$0xff]
    %v205 = vld [vmem:[#allocation5 + $0x270] sm:$0xff]
    %v206 = vld [vmem:[#allocation5 + $0x278] sm:$0xff]
    %v207 = vld [vmem:[#allocation5 + $0x280] sm:$0xff]
    %v208 = vld [vmem:[#allocation5 + $0x288] sm:$0xff]
    %v209 = vld [vmem:[#allocation5 + $0x290] sm:$0xff]
    %v210 = vld [vmem:[#allocation5 + $0x298] sm:$0xff]
    %v211 = vld [vmem:[#allocation5 + $0x2a0] sm:$0xff]
    %v212 = vld [vmem:[#allocation5 + $0x2a8] sm:$0xff]
    %v213 = vld [vmem:[#allocation5 + $0x2b0] sm:$0xff]
    %v214 = vld [vmem:[#allocation5 + $0x2b8] sm:$0xff]
    %v215 = vld [vmem:[#allocation5 + $0x2c0] sm:$0xff]
    %v216 = vld [vmem:[#allocation5 + $0x2c8] sm:$0xff]
    %v217 = vld [vmem:[#allocation5 + $0x2d0] sm:$0xff]
    %v218 = vld [vmem:[#allocation5 + $0x2d8] sm:$0xff]
    %v219 = vld [vmem:[#allocation5 + $0x2e0] sm:$0xff]
    %v220 = vld [vmem:[#allocation5 + $0x2e8] sm:$0xff]
    %v221 = vld [vmem:[#allocation5 + $0x2f0] sm:$0xff]
    %v222 = vld [vmem:[#allocation5 + $0x2f8] sm:$0xff]
    %v223 = vld [vmem:[#allocation5 + $0x300] sm:$0xff]
    %v224 = vld [vmem:[#allocation5 + $0x308] sm:$0xff]
    %v225 = vld [vmem:[#allocation5 + $0x310] sm:$0xff]
    %v226 = vld [vmem:[#allocation5 + $0x318] sm:$0xff]
    %v227 = vld [vmem:[#allocation5 + $0x320] sm:$0xff]
    %v228 = vld [vmem:[#allocation5 + $0x328] sm:$0xff]
    %v229 = vld [vmem:[#allocation5 + $0x330] sm:$0xff]
    %v230 = vld [vmem:[#allocation5 + $0x338] sm:$0xff]
    %v231 = vld [vmem:[#allocation5 + $0x340] sm:$0xff]
    %v232 = vld [vmem:[#allocation5 + $0x348] sm:$0xff]
    %v233 = vld [vmem:[#allocation5 + $0x350] sm:$0xff]
    %v234 = vld [vmem:[#allocation5 + $0x358] sm:$0xff]
    %v235 = vld [vmem:[#allocation5 + $0x360] sm:$0xff]
    %v236 = vld [vmem:[#allocation5 + $0x368] sm:$0xff]
    %v237 = vld [vmem:[#allocation5 + $0x370] sm:$0xff]
    %v238 = vld [vmem:[#allocation5 + $0x378] sm:$0xff]
    %v239 = vld [vmem:[#allocation5 + $0x380] sm:$0xff]
    %v240 = vld [vmem:[#allocation5 + $0x388] sm:$0xff]
    %v241 = vld [vmem:[#allocation5 + $0x390] sm:$0xff]
    %v242 = vld [vmem:[#allocation5 + $0x398] sm:$0xff]
    %v243 = vld [vmem:[#allocation5 + $0x3a0] sm:$0xff]
    %v244 = vld [vmem:[#allocation5 + $0x3a8] sm:$0xff]
    %v245 = vld [vmem:[#allocation5 + $0x3b0] sm:$0xff]
    %v246 = vld [vmem:[#allocation5 + $0x3b8] sm:$0xff]
    %v247 = vld [vmem:[#allocation5 + $0x3c0] sm:$0xff]
    %v248 = vld [vmem:[#allocation5 + $0x3c8] sm:$0xff]
    %v249 = vld [vmem:[#allocation5 + $0x3d0] sm:$0xff]
    %v250 = vld [vmem:[#allocation5 + $0x3d8] sm:$0xff]
    %v251 = vld [vmem:[#allocation5 + $0x3e0] sm:$0xff]
    %v252 = vld [vmem:[#allocation5 + $0x3e8] sm:$0xff]
    %v253 = vld [vmem:[#allocation5 + $0x3f0] sm:$0xff]
    %v254 = vld [vmem:[#allocation5 + $0x3f8] sm:$0xff]
    %v255 = vld [vmem:[%s5] sm:$0xf]
    %v256 = vld [vmem:[#allocation7] sm:$0xff]
    %v257 = vld [vmem:[#allocation7 + $0x8] sm:$0xff]
    %v258 = vld [vmem:[#allocation7 + $0x10] sm:$0xff]
    %v259 = vld [vmem:[#allocation7 + $0x18] sm:$0xff]
    %v260 = vld [vmem:[#allocation7 + $0x20] sm:$0xff]
    %v261 = vld [vmem:[#allocation7 + $0x28] sm:$0xff]
    %v262 = vld [vmem:[#allocation7 + $0x30] sm:$0xff]
    %v263 = vld [vmem:[#allocation7 + $0x38] sm:$0xff]
    %v264 = vld [vmem:[#allocation7 + $0x40] sm:$0xff]
    %v265 = vld [vmem:[#allocation7 + $0x48] sm:$0xff]
    %v266 = vld [vmem:[#allocation7 + $0x50] sm:$0xff]
    %v267 = vld [vmem:[#allocation7 + $0x58] sm:$0xff]
    %v268 = vld [vmem:[#allocation7 + $0x60] sm:$0xff]
    %v269 = vld [vmem:[#allocation7 + $0x68] sm:$0xff]
    %v270 = vld [vmem:[#allocation7 + $0x70] sm:$0xff]
    %v271 = vld [vmem:[#allocation7 + $0x78] sm:$0xff]
    %v272 = vld [vmem:[%s7] sm:$0x1]
    %v273 = vld [vmem:[#allocation8] sm:$0xff]
    %v274 = vld [vmem:[#allocation8 + $0x8] sm:$0xff]
    %v275 = vld [vmem:[#allocation8 + $0x10] sm:$0xff]
    %v276 = vld [vmem:[#allocation8 + $0x18] sm:$0xff]
    %v277 = vld [vmem:[#allocation8 + $0x20] sm:$0xff]
    %v278 = vld [vmem:[#allocation8 + $0x28] sm:$0xff]
    %v279 = vld [vmem:[#allocation8 + $0x30] sm:$0xff]
    %v280 = vld [vmem:[#allocation8 + $0x38] sm:$0xff]
    %v281 = vld [vmem:[#allocation8 + $0x40] sm:$0xff]
    %v282 = vld [vmem:[#allocation8 + $0x48] sm:$0xff]
    %v283 = vld [vmem:[#allocation8 + $0x50] sm:$0xff]
    %v284 = vld [vmem:[#allocation8 + $0x58] sm:$0xff]
    %v285 = vld [vmem:[#allocation8 + $0x60] sm:$0xff]
    %v286 = vld [vmem:[#allocation8 + $0x68] sm:$0xff]
    %v287 = vld [vmem:[#allocation8 + $0x70] sm:$0xff]
    %v288 = vld [vmem:[#allocation8 + $0x78] sm:$0xff]
    %v289 = vld [vmem:[%s9] sm:$0x1]
    %v290 = vld [vmem:[%s10] sm:$0x1]
    %v291 = vld [vmem:[#allocation2] sm:$0x1]
    %v292 = vld [vmem:[#allocation10] sm:$0xff]
    %v293 = vld [vmem:[#allocation10 + $0x8] sm:$0xff]
    %v294 = vld [vmem:[#allocation10 + $0x10] sm:$0xff]
    %v295 = vld [vmem:[#allocation10 + $0x18] sm:$0xff]
    %v296 = vld [vmem:[#allocation10 + $0x20] sm:$0xff]
    %v297 = vld [vmem:[#allocation10 + $0x28] sm:$0xff]
    %v298 = vld [vmem:[#allocation10 + $0x30] sm:$0xff]
    %v299 = vld [vmem:[#allocation10 + $0x38] sm:$0xff]
    %v300 = vld [vmem:[#allocation10 + $0x40] sm:$0xff]
    %v301 = vld [vmem:[#allocation10 + $0x48] sm:$0xff]
    %v302 = vld [vmem:[#allocation10 + $0x50] sm:$0xff]
    %v303 = vld [vmem:[#allocation10 + $0x58] sm:$0xff]
    %v304 = vld [vmem:[#allocation10 + $0x60] sm:$0xff]
    %v305 = vld [vmem:[#allocation10 + $0x68] sm:$0xff]
    %v306 = vld [vmem:[#allocation10 + $0x70] sm:$0xff]
    %v307 = vld [vmem:[#allocation10 + $0x78] sm:$0xff]
    %v309 = vlaneseq
    %v310 = vshrl.u32 %v309, 7
    %v311 = vsub.s32 0, %v310
    %v312 = vrot.slane %v255, %v311
    %v313 = vlaneseq
    %v314 = vshrl.u32 %v313, 7
    %v315 = vsub.s32 1, %v314
    %v316 = vrot.slane %v255, %v315
    %v317 = vlaneseq
    %v318 = vshrl.u32 %v317, 7
    %v319 = vsub.s32 2, %v318
    %v320 = vrot.slane %v255, %v319
    %v321 = vlaneseq
    %v322 = vshrl.u32 %v321, 7
    %v323 = vsub.s32 3, %v322
    %v324 = vrot.slane %v255, %v323
    %329 = vmatprep.subr.mxu0 %v188
    %330 = vmatpush1.msra.mxu0 %v187
    %331 = vmatprep.subr.mxu0 %v184
    %332 = vmatpush1.msra.mxu0 %v183
    %333 = vmatprep.subr.mxu0 %v180
    %334 = vmatpush1.msra.mxu0 %v179
    %335 = vmatprep.subr.mxu0 %v176
    %336 = vmatpush1.msra.mxu0 %v175
    %337 = vmatprep.subr.mxu0 %v172
    %338 = vmatpush1.msra.mxu0 %v171
    %339 = vmatprep.subr.mxu0 %v168
    %340 = vmatpush1.msra.mxu0 %v167
    %341 = vmatprep.subr.mxu0 %v164
    %342 = vmatpush1.msra.mxu0 %v163
    %343 = vmatprep.subr.mxu0 %v160
    %344 = vmatpush1.msra.mxu0 %v159
    %345 = vmatprep.subr.mxu0 %v156
    %346 = vmatpush1.msra.mxu0 %v155
    %347 = vmatprep.subr.mxu0 %v152
    %348 = vmatpush1.msra.mxu0 %v151
    %349 = vmatprep.subr.mxu0 %v148
    %350 = vmatpush1.msra.mxu0 %v147
    %351 = vmatprep.subr.mxu0 %v144
    %352 = vmatpush1.msra.mxu0 %v143
    %353 = vmatprep.subr.mxu0 %v140
    %354 = vmatpush1.msra.mxu0 %v139
    %355 = vmatprep.subr.mxu0 %v136
    %356 = vmatpush1.msra.mxu0 %v135
    %357 = vmatprep.subr.mxu0 %v132
    %358 = vmatpush1.msra.mxu0 %v131
    %359 = vmatprep.subr.mxu0 %v128
    %360 = vmatpush1.msra.mxu0 %v127
    %361 = vmatprep.subr.mxu0 %v252
    %362 = vmatpush2.msra.mxu0 %v251
    %363 = vmatprep.subr.mxu0 %v248
    %364 = vmatpush2.msra.mxu0 %v247
    %365 = vmatprep.subr.mxu0 %v244
    %366 = vmatpush2.msra.mxu0 %v243
    %367 = vmatprep.subr.mxu0 %v240
    %368 = vmatpush2.msra.mxu0 %v239
    %369 = vmatprep.subr.mxu0 %v236
    %370 = vmatpush2.msra.mxu0 %v235
    %371 = vmatprep.subr.mxu0 %v232
    %372 = vmatpush2.msra.mxu0 %v231
    %373 = vmatprep.subr.mxu0 %v228
    %374 = vmatpush2.msra.mxu0 %v227
    %375 = vmatprep.subr.mxu0 %v224
    %376 = vmatpush2.msra.mxu0 %v223
    %377 = vmatprep.subr.mxu0 %v220
    %378 = vmatpush2.msra.mxu0 %v219
    %379 = vmatprep.subr.mxu0 %v216
    %380 = vmatpush2.msra.mxu0 %v215
    %381 = vmatprep.subr.mxu0 %v212
    %382 = vmatpush2.msra.mxu0 %v211
    %383 = vmatprep.subr.mxu0 %v208
    %384 = vmatpush2.msra.mxu0 %v207
    %385 = vmatprep.subr.mxu0 %v204
    %386 = vmatpush2.msra.mxu0 %v203
    %387 = vmatprep.subr.mxu0 %v200
    %388 = vmatpush2.msra.mxu0 %v199
    %389 = vmatprep.subr.mxu0 %v196
    %390 = vmatpush2.msra.mxu0 %v195
    %391 = vmatprep.subr.mxu0 %v192
    %392 = vmatpush2.msra.mxu0 %v191
    %393 = vmatprep.mubr.f32.mxu0 %v125
    %394 = vmatmul.mubr.f32.gmra.mxu0 %v124
    %v395 = vpop.f32.mrf.mxu0
    %v396 = vadd.f32 %v312, %v395
    %v397 = vpop.f32.mrf.mxu0
    %v398 = vadd.f32 %v316, %v397
    %399 = vdwg.mxu0
    %400 = vmatprep.subr.mxu0 %v190
    %401 = vmatpush1.msra.mxu0 %v189
    %402 = vmatprep.subr.mxu0 %v186
    %403 = vmatpush1.msra.mxu0 %v185
    %404 = vmatprep.subr.mxu0 %v182
    %405 = vmatpush1.msra.mxu0 %v181
    %406 = vmatprep.subr.mxu0 %v178
    %407 = vmatpush1.msra.mxu0 %v177
    %408 = vmatprep.subr.mxu0 %v174
    %409 = vmatpush1.msra.mxu0 %v173
    %410 = vmatprep.subr.mxu0 %v170
    %411 = vmatpush1.msra.mxu0 %v169
    %412 = vmatprep.subr.mxu0 %v166
    %413 = vmatpush1.msra.mxu0 %v165
    %414 = vmatprep.subr.mxu0 %v162
    %415 = vmatpush1.msra.mxu0 %v161
    %416 = vmatprep.subr.mxu0 %v158
    %417 = vmatpush1.msra.mxu0 %v157
    %418 = vmatprep.subr.mxu0 %v154
    %419 = vmatpush1.msra.mxu0 %v153
    %420 = vmatprep.subr.mxu0 %v150
    %421 = vmatpush1.msra.mxu0 %v149
    %422 = vmatprep.subr.mxu0 %v146
    %423 = vmatpush1.msra.mxu0 %v145
    %424 = vmatprep.subr.mxu0 %v142
    %425 = vmatpush1.msra.mxu0 %v141
    %426 = vmatprep.subr.mxu0 %v138
    %427 = vmatpush1.msra.mxu0 %v137
    %428 = vmatprep.subr.mxu0 %v134
    %429 = vmatpush1.msra.mxu0 %v133
    %430 = vmatprep.subr.mxu0 %v130
    %431 = vmatpush1.msra.mxu0 %v129
    %432 = vmatprep.subr.mxu0 %v254
    %433 = vmatpush2.msra.mxu0 %v253
    %434 = vmatprep.subr.mxu0 %v250
    %435 = vmatpush2.msra.mxu0 %v249
    %436 = vmatprep.subr.mxu0 %v246
    %437 = vmatpush2.msra.mxu0 %v245
    %438 = vmatprep.subr.mxu0 %v242
    %439 = vmatpush2.msra.mxu0 %v241
    %440 = vmatprep.subr.mxu0 %v238
    %441 = vmatpush2.msra.mxu0 %v237
    %442 = vmatprep.subr.mxu0 %v234
    %443 = vmatpush2.msra.mxu0 %v233
    %444 = vmatprep.subr.mxu0 %v230
    %445 = vmatpush2.msra.mxu0 %v229
    %446 = vmatprep.subr.mxu0 %v226
    %447 = vmatpush2.msra.mxu0 %v225
    %448 = vmatprep.subr.mxu0 %v222
    %449 = vmatpush2.msra.mxu0 %v221
    %450 = vmatprep.subr.mxu0 %v218
    %451 = vmatpush2.msra.mxu0 %v217
    %452 = vmatprep.subr.mxu0 %v214
    %453 = vmatpush2.msra.mxu0 %v213
    %454 = vmatprep.subr.mxu0 %v210
    %455 = vmatpush2.msra.mxu0 %v209
    %456 = vmatprep.subr.mxu0 %v206
    %457 = vmatpush2.msra.mxu0 %v205
    %458 = vmatprep.subr.mxu0 %v202
    %459 = vmatpush2.msra.mxu0 %v201
    %460 = vmatprep.subr.mxu0 %v198
    %461 = vmatpush2.msra.mxu0 %v197
    %462 = vmatprep.subr.mxu0 %v194
    %463 = vmatpush2.msra.mxu0 %v193
    %464 = vmatprep.mubr.f32.mxu0 %v125
    %465 = vmatmul.mubr.f32.gmra.mxu0 %v124
    %v466 = vpop.f32.mrf.mxu0
    %v467 = vadd.f32 %v320, %v466
    %v468 = vpop.f32.mrf.mxu0
    %v469 = vadd.f32 %v324, %v468
    %470 = vdwg.mxu0
    %v471 = vxor.u32 %v396, 2147483648
    %v472 = vmul.f32 %v471, 1.442695
    %v473 = vpow.pop %v472
    %v474 = vadd.f32 %v473, 1.0
    %v475 = vrcp.pop %v474
    %v476 = vmul.f32 1.0, %v475
    %v477 = vxor.u32 %v398, 2147483648
    %v478 = vmul.f32 %v477, 1.442695
    %v479 = vpow.pop %v478
    %v480 = vadd.f32 %v479, 1.0
    %v481 = vrcp.pop %v480
    %v482 = vmul.f32 1.0, %v481
    %v483 = vtanh.pop %v467
    %v484 = vxor.u32 %v469, 2147483648
    %v485 = vmul.f32 %v484, 1.442695
    %v486 = vpow.pop %v485
    %v487 = vadd.f32 %v486, 1.0
    %v488 = vrcp.pop %v487
    %v489 = vmul.f32 1.0, %v488
    %v490 = vmul.f32 %v482, %v126
    %v491 = vmul.f32 %v476, %v483
    %v492 = vadd.f32 %v490, %v491
    %v493 = vtanh.pop %v492
    %v494 = vmul.f32 %v489, %v493
    %v496 = vlaneseq
    %v497 = vshrl.u32 %v496, 7
    %v498 = vsub.s32 0, %v497
    %v499 = vrot.slane %v272, %v498
    %501 = vmatprep.subr.mxu0 0.0
    %502 = vmatpush1.msra.mxu0 %v271
    %503 = vmatprep.subr.mxu0 0.0
    %504 = vmatpush1.msra.mxu0 %v270
    %505 = vmatprep.subr.mxu0 0.0
    %506 = vmatpush1.msra.mxu0 %v269
    %507 = vmatprep.subr.mxu0 0.0
    %508 = vmatpush1.msra.mxu0 %v268
    %509 = vmatprep.subr.mxu0 0.0
    %510 = vmatpush1.msra.mxu0 %v267
    %511 = vmatprep.subr.mxu0 0.0
    %512 = vmatpush1.msra.mxu0 %v266
    %513 = vmatprep.subr.mxu0 0.0
    %514 = vmatpush1.msra.mxu0 %v265
    %515 = vmatprep.subr.mxu0 0.0
    %516 = vmatpush1.msra.mxu0 %v264
    %517 = vmatprep.subr.mxu0 0.0
    %518 = vmatpush1.msra.mxu0 %v263
    %519 = vmatprep.subr.mxu0 0.0
    %520 = vmatpush1.msra.mxu0 %v262
    %521 = vmatprep.subr.mxu0 0.0
    %522 = vmatpush1.msra.mxu0 %v261
    %523 = vmatprep.subr.mxu0 0.0
    %524 = vmatpush1.msra.mxu0 %v260
    %525 = vmatprep.subr.mxu0 0.0
    %526 = vmatpush1.msra.mxu0 %v259
    %527 = vmatprep.subr.mxu0 0.0
    %528 = vmatpush1.msra.mxu0 %v258
    %529 = vmatprep.subr.mxu0 0.0
    %530 = vmatpush1.msra.mxu0 %v257
    %531 = vmatprep.subr.mxu0 0.0
    %532 = vmatpush1.msra.mxu0 %v256
    %533 = vmatprep.subr.mxu0 0.0
    %534 = vmatpush2.msra.mxu0 0.0
    %535 = vmatprep.subr.mxu0 0.0
    %536 = vmatpush2.msra.mxu0 0.0
    %537 = vmatprep.subr.mxu0 0.0
    %538 = vmatpush2.msra.mxu0 0.0
    %539 = vmatprep.subr.mxu0 0.0
    %540 = vmatpush2.msra.mxu0 0.0
    %541 = vmatprep.subr.mxu0 0.0
    %542 = vmatpush2.msra.mxu0 0.0
    %543 = vmatprep.subr.mxu0 0.0
    %544 = vmatpush2.msra.mxu0 0.0
    %545 = vmatprep.subr.mxu0 0.0
    %546 = vmatpush2.msra.mxu0 0.0
    %547 = vmatprep.subr.mxu0 0.0
    %548 = vmatpush2.msra.mxu0 0.0
    %549 = vmatprep.subr.mxu0 0.0
    %550 = vmatpush2.msra.mxu0 0.0
    %551 = vmatprep.subr.mxu0 0.0
    %552 = vmatpush2.msra.mxu0 0.0
    %553 = vmatprep.subr.mxu0 0.0
    %554 = vmatpush2.msra.mxu0 0.0
    %555 = vmatprep.subr.mxu0 0.0
    %556 = vmatpush2.msra.mxu0 0.0
    %557 = vmatprep.subr.mxu0 0.0
    %558 = vmatpush2.msra.mxu0 0.0
    %559 = vmatprep.subr.mxu0 0.0
    %560 = vmatpush2.msra.mxu0 0.0
    %561 = vmatprep.subr.mxu0 0.0
    %562 = vmatpush2.msra.mxu0 0.0
    %563 = vmatprep.subr.mxu0 0.0
    %564 = vmatpush2.msra.mxu0 0.0
    %565 = vmatprep.mubr.f32.mxu0 0.0
    %566 = vmatmul.mubr.f32.gmra.mxu0 %v123
    %v567 = vpop.f32.mrf.mxu0
    %v568 = vadd.f32 %v499, %v567
    %v569 = vpop.f32.mrf.mxu0
    %570 = vdwg.mxu0
    %v571 = vmul.f32 %v494, %v568
    %572 = vmatprep.subr.mxu0 0.0
    %573 = vmatpush1.msra.mxu0 %v307
    %574 = vmatprep.subr.mxu0 0.0
    %575 = vmatpush1.msra.mxu0 %v306
    %576 = vmatprep.subr.mxu0 0.0
    %577 = vmatpush1.msra.mxu0 %v305
    %578 = vmatprep.subr.mxu0 0.0
    %579 = vmatpush1.msra.mxu0 %v304
    %580 = vmatprep.subr.mxu0 0.0
    %581 = vmatpush1.msra.mxu0 %v303
    %582 = vmatprep.subr.mxu0 0.0
    %583 = vmatpush1.msra.mxu0 %v302
    %584 = vmatprep.subr.mxu0 0.0
    %585 = vmatpush1.msra.mxu0 %v301
    %586 = vmatprep.subr.mxu0 0.0
    %587 = vmatpush1.msra.mxu0 %v300
    %588 = vmatprep.subr.mxu0 0.0
    %589 = vmatpush1.msra.mxu0 %v299
    %590 = vmatprep.subr.mxu0 0.0
    %591 = vmatpush1.msra.mxu0 %v298
    %592 = vmatprep.subr.mxu0 0.0
    %593 = vmatpush1.msra.mxu0 %v297
    %594 = vmatprep.subr.mxu0 0.0
    %595 = vmatpush1.msra.mxu0 %v296
    %596 = vmatprep.subr.mxu0 0.0
    %597 = vmatpush1.msra.mxu0 %v295
    %598 = vmatprep.subr.mxu0 0.0
    %599 = vmatpush1.msra.mxu0 %v294
    %600 = vmatprep.subr.mxu0 0.0
    %601 = vmatpush1.msra.mxu0 %v293
    %602 = vmatprep.subr.mxu0 0.0
    %603 = vmatpush1.msra.mxu0 %v292
    %604 = vmatprep.subr.mxu0 0.0
    %605 = vmatpush2.msra.mxu0 0.0
    %606 = vmatprep.subr.mxu0 0.0
    %607 = vmatpush2.msra.mxu0 0.0
    %608 = vmatprep.subr.mxu0 0.0
    %609 = vmatpush2.msra.mxu0 0.0
    %610 = vmatprep.subr.mxu0 0.0
    %611 = vmatpush2.msra.mxu0 0.0
    %612 = vmatprep.subr.mxu0 0.0
    %613 = vmatpush2.msra.mxu0 0.0
    %614 = vmatprep.subr.mxu0 0.0
    %615 = vmatpush2.msra.mxu0 0.0
    %616 = vmatprep.subr.mxu0 0.0
    %617 = vmatpush2.msra.mxu0 0.0
    %618 = vmatprep.subr.mxu0 0.0
    %619 = vmatpush2.msra.mxu0 0.0
    %620 = vmatprep.subr.mxu0 0.0
    %621 = vmatpush2.msra.mxu0 0.0
    %622 = vmatprep.subr.mxu0 0.0
    %623 = vmatpush2.msra.mxu0 0.0
    %624 = vmatprep.subr.mxu0 0.0
    %625 = vmatpush2.msra.mxu0 0.0
    %626 = vmatprep.subr.mxu0 0.0
    %627 = vmatpush2.msra.mxu0 0.0
    %628 = vmatprep.subr.mxu0 0.0
    %629 = vmatpush2.msra.mxu0 0.0
    %630 = vmatprep.subr.mxu0 0.0
    %631 = vmatpush2.msra.mxu0 0.0
    %632 = vmatprep.subr.mxu0 0.0
    %633 = vmatpush2.msra.mxu0 0.0
    %634 = vmatprep.subr.mxu0 0.0
    %635 = vmatpush2.msra.mxu0 0.0
    %636 = vmatprep.mubr.f32.mxu0 0.0
    %637 = vmatmul.mubr.f32.gmra.mxu0 %v571
    %v638 = vpop.f32.mrf.mxu0
    %v639 = vadd.f32 0.0, %v638
    %v640 = vpop.f32.mrf.mxu0
    %641 = vdwg.mxu0
    %v642 = vlaneseq
    %v643 = vand.u32 %v642, 127
    %vm644 = vcmp.lt.s32.totalorder %v643, 8
    %v645 = vsel %vm644, %v639, -inf
    %646 = vmax.xlane.f32.xlu0 %v645
    %v647 = vpop.xlane.xlu0 %646
    %v648 = vsub.f32 %v639, %v647
    %v649 = vmul.f32 %v648, 1.442695
    %v650 = vpow.pop %v649
    %v651 = vsel %vm644, %v650, 0.0
    %652 = vadd.xlane.f32.xlu0 %v651
    %v653 = vpop.xlane.xlu0 %652
    %v654 = vrcp.pop %v653
    %v655 = vmul.f32 %v651, %v654
    %v657 = vlaneseq
    %v658 = vshrl.u32 %v657, 7
    %v659 = vsub.s32 0, %v658
    %v660 = vrot.slane %v289, %v659
    %662 = vmatprep.subr.mxu0 0.0
    %663 = vmatpush1.msra.mxu0 %v288
    %664 = vmatprep.subr.mxu0 0.0
    %665 = vmatpush1.msra.mxu0 %v287
    %666 = vmatprep.subr.mxu0 0.0
    %667 = vmatpush1.msra.mxu0 %v286
    %668 = vmatprep.subr.mxu0 0.0
    %669 = vmatpush1.msra.mxu0 %v285
    %670 = vmatprep.subr.mxu0 0.0
    %671 = vmatpush1.msra.mxu0 %v284
    %672 = vmatprep.subr.mxu0 0.0
    %673 = vmatpush1.msra.mxu0 %v283
    %674 = vmatprep.subr.mxu0 0.0
    %675 = vmatpush1.msra.mxu0 %v282
    %676 = vmatprep.subr.mxu0 0.0
    %677 = vmatpush1.msra.mxu0 %v281
    %678 = vmatprep.subr.mxu0 0.0
    %679 = vmatpush1.msra.mxu0 %v280
    %680 = vmatprep.subr.mxu0 0.0
    %681 = vmatpush1.msra.mxu0 %v279
    %682 = vmatprep.subr.mxu0 0.0
    %683 = vmatpush1.msra.mxu0 %v278
    %684 = vmatprep.subr.mxu0 0.0
    %685 = vmatpush1.msra.mxu0 %v277
    %686 = vmatprep.subr.mxu0 0.0
    %687 = vmatpush1.msra.mxu0 %v276
    %688 = vmatprep.subr.mxu0 0.0
    %689 = vmatpush1.msra.mxu0 %v275
    %690 = vmatprep.subr.mxu0 0.0
    %691 = vmatpush1.msra.mxu0 %v274
    %692 = vmatprep.subr.mxu0 0.0
    %693 = vmatpush1.msra.mxu0 %v273
    %694 = vmatprep.subr.mxu0 0.0
    %695 = vmatpush2.msra.mxu0 0.0
    %696 = vmatprep.subr.mxu0 0.0
    %697 = vmatpush2.msra.mxu0 0.0
    %698 = vmatprep.subr.mxu0 0.0
    %699 = vmatpush2.msra.mxu0 0.0
    %700 = vmatprep.subr.mxu0 0.0
    %701 = vmatpush2.msra.mxu0 0.0
    %702 = vmatprep.subr.mxu0 0.0
    %703 = vmatpush2.msra.mxu0 0.0
    %704 = vmatprep.subr.mxu0 0.0
    %705 = vmatpush2.msra.mxu0 0.0
    %706 = vmatprep.subr.mxu0 0.0
    %707 = vmatpush2.msra.mxu0 0.0
    %708 = vmatprep.subr.mxu0 0.0
    %709 = vmatpush2.msra.mxu0 0.0
    %710 = vmatprep.subr.mxu0 0.0
    %711 = vmatpush2.msra.mxu0 0.0
    %712 = vmatprep.subr.mxu0 0.0
    %713 = vmatpush2.msra.mxu0 0.0
    %714 = vmatprep.subr.mxu0 0.0
    %715 = vmatpush2.msra.mxu0 0.0
    %716 = vmatprep.subr.mxu0 0.0
    %717 = vmatpush2.msra.mxu0 0.0
    %718 = vmatprep.subr.mxu0 0.0
    %719 = vmatpush2.msra.mxu0 0.0
    %720 = vmatprep.subr.mxu0 0.0
    %721 = vmatpush2.msra.mxu0 0.0
    %722 = vmatprep.subr.mxu0 0.0
    %723 = vmatpush2.msra.mxu0 0.0
    %724 = vmatprep.subr.mxu0 0.0
    %725 = vmatpush2.msra.mxu0 0.0
    %726 = vmatprep.mubr.f32.mxu0 0.0
    %727 = vmatmul.mubr.f32.gmra.mxu0 %v494
    %v728 = vpop.f32.mrf.mxu0
    %v729 = vadd.f32 %v660, %v728
    %v730 = vpop.f32.mrf.mxu0
    %731 = vdwg.mxu0
    %v732 = vmax.f32 %v729, 0.0
    %v734 = vlaneseq
    %v735 = vshrl.u32 %v734, 7
    %v736 = vsub.s32 0, %v735
    %v737 = vrot.slane %v290, %v736
    %v739 = vmul.f32 %v732, %v737
    %740 = vadd.xlane.f32.xlu0 %v739
    %v741 = vpop.xlane.xlu0 %740
    %v743 = vlaneseq
    %v744 = vshrl.u32 %v743, 7
    %v745 = vsub.s32 0, %v744
    %v746 = vrot.slane %v291, %v745
    %v748 = vadd.f32 %v741, %v746
    %vm749 = vcmp.eq.s32.totalorder %v643, 8
    %751 = vset.pattern.permute.xlu0 0
    %752 = vperm.xlu0 %751, %v748
    %v753 = vpop.permute.xlu0 %752
    %v755 = vsel %vm749, %v753, 0.0
    %v756 = vadd.f32 %v655, %v755
    %757 = vst [vmem:[%s13] sm:$0xff] %v756
    %758 = vst [vmem:[%s14] sm:$0xff] %v494
    %759 = vst [vmem:[%s15] sm:$0xff] %v492
    // Predicated region
    $region74: #{worker_forward.1} parent=1 // pred_check
      _
    $region75: #{worker_forward.1} parent=1 // pred_check_branch
      %761 = sbr.rel (0) target = $region77
    $region76: #{worker_forward.1} parent=1 // pred_region
      _
    $region77: #{worker_forward.1} parent=1 // pred_fallthru
      _
    // Predicated region
    $region78: #{worker_forward.1} parent=1 // pred_check
      _
    $region79: #{worker_forward.1} parent=1 // pred_check_branch
      %763 = sbr.rel (0) target = $region81
    $region80: #{worker_forward.1} parent=1 // pred_region
      _
    $region81: #{worker_forward.1} parent=1 // pred_fallthru
      _
    // Predicated region
    $region82: #{worker_forward.1} parent=1 // pred_check
      _
    $region83: #{worker_forward.1} parent=1 // pred_check_branch
      %765 = sbr.rel (0) target = $region85
    $region84: #{worker_forward.1} parent=1 // pred_region
      _
    $region85: #{worker_forward.1} parent=1 // pred_fallthru
      _
    // Predicated region
    $region86: #{worker_forward.1} parent=1 // pred_check
      _
    $region87: #{worker_forward.1} parent=1 // pred_check_branch
      %767 = sbr.rel (0) target = $region89
    $region88: #{worker_forward.1} parent=1 // pred_region
      _
    $region89: #{worker_forward.1} parent=1 // pred_fallthru
      _
    // Predicated region
    $region90: #{worker_forward.1} parent=1 // pred_check
      _
    $region91: #{worker_forward.1} parent=1 // pred_check_branch
      %769 = sbr.rel (0) target = $region93
    $region92: #{worker_forward.1} parent=1 // pred_region
      _
    $region93: #{worker_forward.1} parent=1 // pred_fallthru
      _
    // Predicated region
    $region94: #{worker_forward.1} parent=1 // pred_check
      _
    $region95: #{worker_forward.1} parent=1 // pred_check_branch
      %771 = sbr.rel (0) target = $region97
    $region96: #{worker_forward.1} parent=1 // pred_region
      _
    $region97: #{worker_forward.1} parent=1 // pred_fallthru
      _
    %772 = vsyncpa [#allocation4], 1
    %773 = vsyncpa [#allocation6], 1
    %774 = vsyncpa [#allocation9], 1

</llo_original>
